<compile_context>
chip_gen: v6e
topology: v6e:2x2x1
jax: 0.10.0
libtpu: 0.0.40
codegen_flags: <defaults>
</compile_context>

<pallas_src>
import functools

import jax
import jax.numpy as jnp
from jax.experimental import pallas as pl
from jax.experimental.pallas import tpu as pltpu


def _round_up(x, m):
    return ((x + m - 1) // m) * m


def _cls_head_kernel(x_ref, w1_ref, b1_ref, w2_ref, b2_ref, out_ref):
    # x:  [tb, D] (f32 or bf16)      D = hidden_size + num_extra_dims
    # w1: [D, D]  b1: [1, D] f32     (weights pre-transposed to (in, out))
    # w2: [D, L]  b2: [1, L] f32     (L = num_labels, unpadded)
    x = x_ref[...].astype(w1_ref.dtype)               # match MXU operand dtype
    h = jnp.dot(x, w1_ref[...], preferred_element_type=jnp.float32)
    h = jnp.tanh(h + b1_ref[...])                     # f32 bias + f32 tanh (EUP)
    y = jnp.dot(h.astype(w2_ref.dtype), w2_ref[...],
                preferred_element_type=jnp.float32)
    out_ref[...] = (y + b2_ref[...]).astype(out_ref.dtype)


def prepare_params(w_dense, b_dense, w_out, b_out, param_dtype=jnp.bfloat16):
    """One-time parameter packing (hoisted out of the per-call path).

    w_dense: [D, D] PyTorch (out, in) layout; b_dense: [D]
    w_out:   [L, D] PyTorch (out, in) layout; b_out:   [L]
    Weights are transposed to (in, out) and stored in `param_dtype` (bf16 by
    default -> bf16 MXU operands with f32 accumulation); biases stay f32.
    """
    D = w_dense.shape[0]
    L = w_out.shape[0]
    w1 = jnp.asarray(w_dense, jnp.float32).T.astype(param_dtype)   # [D, D]
    b1 = jnp.asarray(b_dense, jnp.float32).reshape(1, D)
    w2 = jnp.asarray(w_out, jnp.float32).T.astype(param_dtype)     # [D, L]
    b2 = jnp.asarray(b_out, jnp.float32).reshape(1, L)
    return {"w1": w1, "b1": b1, "w2": w2, "b2": b2, "num_labels": L}


@jax.jit
def _head_small(x, w1, b1, w2, b2):
    """Single invocation: all operands whole-array resident in VMEM, no grid."""
    B = x.shape[0]
    L = w2.shape[1]
    vmem = pl.BlockSpec(memory_space=pltpu.MemorySpace.VMEM)
    return pl.pallas_call(
        _cls_head_kernel,
        out_shape=jax.ShapeDtypeStruct((B, L), jnp.float32),
        in_specs=[vmem, vmem, vmem, vmem, vmem],
        out_specs=vmem,
    )(x, w1, b1, w2, b2)


@functools.partial(jax.jit, static_argnames=("batch_tile",))
def _head_tiled(x, w1, b1, w2, b2, *, batch_tile):
    """Large-batch path: tile the batch dim; weights/biases stay VMEM-resident
    across steps; batch axis marked parallel (shards over v7x's two TCs)."""
    B, D = x.shape
    L = w2.shape[1]
    tb = batch_tile
    # TODO(synk): if ("parallel",) does not actually engage megacore on v7x,
    #             switch to pltpu.CORE_PARALLEL / explicit core_map split.
    return pl.pallas_call(
        _cls_head_kernel,
        out_shape=jax.ShapeDtypeStruct((B, L), jnp.float32),
        grid=(pl.cdiv(B, tb),),
        in_specs=[
            pl.BlockSpec((tb, D), lambda i: (i, 0)),
            pl.BlockSpec((D, D), lambda i: (0, 0)),
            pl.BlockSpec((1, D), lambda i: (0, 0)),
            pl.BlockSpec((D, L), lambda i: (0, 0)),
            pl.BlockSpec((1, L), lambda i: (0, 0)),
        ],
        out_specs=pl.BlockSpec((tb, L), lambda i: (i, 0)),
        compiler_params=pltpu.CompilerParams(
            dimension_semantics=("parallel",),
        ),
    )(x, w1, b1, w2, b2)


def classification_head(features, params, *, batch_tile=4096):
    """features: [B, D] (f32 or bf16) -> logits [B, num_labels] f32."""
    x = jnp.asarray(features)
    B = x.shape[0]
    if B <= batch_tile:
        return _head_small(x, params["w1"], params["b1"],
                           params["w2"], params["b2"])
    # Clamp the tile so the grid keeps >= 2 steps (both v7x TensorCores busy).
    tb = min(batch_tile, _round_up(pl.cdiv(B, 2), 8))
    return _head_tiled(x, params["w1"], params["b1"],
                       params["w2"], params["b2"], batch_tile=tb)


def _reference(features, w_dense, b_dense, w_out, b_out, dtype=jnp.float32):
    """Pure-JAX reference; `dtype` controls the matmul operand precision so the
    bf16 kernel path can be checked against a bf16-matched reference."""
    x = jnp.asarray(features, jnp.float32).astype(dtype)
    w1 = jnp.asarray(w_dense, jnp.float32).astype(dtype)
    w2 = jnp.asarray(w_out, jnp.float32).astype(dtype)
    h = jnp.tanh(jnp.dot(x, w1.T, preferred_element_type=jnp.float32) + b_dense)
    return jnp.dot(h.astype(dtype), w2.T,
                   preferred_element_type=jnp.float32) + b_out


if __name__ == "__main__":
    # Config consistent with the module: hidden_size=28, num_extra_dims=4
    # -> total_dims=32; num_labels=4; batch=8.
    hidden_size = 28
    num_extra_dims = 4
    total_dims = hidden_size + num_extra_dims
    num_labels = 4
    batch = 8

    key = jax.random.PRNGKey(0)
    k_feat, k_w1, k_b1, k_w2, k_b2, k_big = jax.random.split(key, 6)

    features = jax.random.normal(k_feat, (batch, total_dims), dtype=jnp.float32)
    bound = 1.0 / (total_dims ** 0.5)
    w_dense = jax.random.uniform(k_w1, (total_dims, total_dims),
                                 minval=-bound, maxval=bound, dtype=jnp.float32)
    b_dense = jax.random.uniform(k_b1, (total_dims,),
                                 minval=-bound, maxval=bound, dtype=jnp.float32)
    w_out = jax.random.uniform(k_w2, (num_labels, total_dims),
                               minval=-bound, maxval=bound, dtype=jnp.float32)
    b_out = jax.random.uniform(k_b2, (num_labels,),
                               minval=-bound, maxval=bound, dtype=jnp.float32)

    # ---- exact f32 path -----------------------------------------------------
    params_f32 = prepare_params(w_dense, b_dense, w_out, b_out,
                                param_dtype=jnp.float32)

    logits = jax.block_until_ready(classification_head(features, params_f32))
    ref = _reference(features, w_dense, b_dense, w_out, b_out)
    assert logits.shape == (batch, num_labels)
    assert jnp.allclose(logits, ref, atol=1e-5, rtol=1e-5), "small f32 mismatch"

    # Tiled path with a ragged last tile (B % tb != 0) and >= 2 grid steps.
    big = jax.random.normal(k_big, (1000, total_dims), dtype=jnp.float32)
    logits_big = jax.block_until_ready(
        classification_head(big, params_f32, batch_tile=256))
    ref_big = _reference(big, w_dense, b_dense, w_out, b_out)
    assert logits_big.shape == (1000, num_labels)
    assert jnp.allclose(logits_big, ref_big, atol=1e-5, rtol=1e-5), \
        "tiled f32 mismatch"

    # ---- bf16 fast path (default prepare_params) ----------------------------
    params_bf16 = prepare_params(w_dense, b_dense, w_out, b_out)
    features_bf16 = features.astype(jnp.bfloat16)   # as a bf16 producer would feed
    big_bf16 = big.astype(jnp.bfloat16)

    logits_b = jax.block_until_ready(
        classification_head(features_bf16, params_bf16))
    ref_b = _reference(features, w_dense, b_dense, w_out, b_out,
                       dtype=jnp.bfloat16)
    assert logits_b.shape == (batch, num_labels)
    assert logits_b.dtype == jnp.float32
    assert jnp.allclose(logits_b, ref_b, atol=2e-3, rtol=2e-3), \
        "small bf16 mismatch"

    logits_big_b = jax.block_until_ready(
        classification_head(big_bf16, params_bf16, batch_tile=256))
    ref_big_b = _reference(big, w_dense, b_dense, w_out, b_out,
                           dtype=jnp.bfloat16)
    assert jnp.allclose(logits_big_b, ref_big_b, atol=2e-3, rtol=2e-3), \
        "tiled bf16 mismatch"

    print("KERNEL_OK")
</pallas_src>

<mosaic_0001>
module attributes {stable_mosaic.version = 11 : i64} {
  func.func @_cls_head_kernel(%arg0: memref<8x32xf32, #tpu.memory_space<vmem>>, %arg1: memref<32x32xf32, #tpu.memory_space<vmem>>, %arg2: memref<1x32xf32, #tpu.memory_space<vmem>>, %arg3: memref<32x4xf32, #tpu.memory_space<vmem>>, %arg4: memref<1x4xf32, #tpu.memory_space<vmem>>, %arg5: memref<8x4xf32, #tpu.memory_space<vmem>>) attributes {dimension_semantics = [], scalar_prefetch = 0 : i64, scratch_operands = 0 : i64, tpu.core_type = #tpu.core_type<tc>} {
    %c0 = arith.constant 0 : index
    %c0_0 = arith.constant 0 : index
    %0 = vector.load %arg0[%c0, %c0_0] : memref<8x32xf32, #tpu.memory_space<vmem>>, vector<8x32xf32>
    %c0_1 = arith.constant 0 : index
    %c0_2 = arith.constant 0 : index
    %1 = vector.load %arg1[%c0_1, %c0_2] : memref<32x32xf32, #tpu.memory_space<vmem>>, vector<32x32xf32>
    %cst = arith.constant dense<0.000000e+00> : vector<8x32xf32>
    %2 = tpu.matmul %0, %1, %cst {dimension_numbers = #tpu.dot_dimension_numbers<[1], [0], [0], [1], [0, 0, 1, 1], [], []>} : vector<8x32xf32>, vector<32x32xf32>, vector<8x32xf32> -> vector<8x32xf32>
    %c0_3 = arith.constant 0 : index
    %c0_4 = arith.constant 0 : index
    %3 = vector.load %arg2[%c0_3, %c0_4] : memref<1x32xf32, #tpu.memory_space<vmem>>, vector<1x32xf32>
    %4 = vector.broadcast %3 : vector<1x32xf32> to vector<8x32xf32>
    %5 = arith.addf %2, %4 : vector<8x32xf32>
    %6 = math.tanh %5 : vector<8x32xf32>
    %c0_5 = arith.constant 0 : index
    %c0_6 = arith.constant 0 : index
    %7 = vector.load %arg3[%c0_5, %c0_6] : memref<32x4xf32, #tpu.memory_space<vmem>>, vector<32x4xf32>
    %cst_7 = arith.constant dense<0.000000e+00> : vector<8x4xf32>
    %8 = tpu.matmul %6, %7, %cst_7 {dimension_numbers = #tpu.dot_dimension_numbers<[1], [0], [0], [1], [0, 0, 1, 1], [], []>} : vector<8x32xf32>, vector<32x4xf32>, vector<8x4xf32> -> vector<8x4xf32>
    %c0_8 = arith.constant 0 : index
    %c0_9 = arith.constant 0 : index
    %9 = vector.load %arg4[%c0_8, %c0_9] : memref<1x4xf32, #tpu.memory_space<vmem>>, vector<1x4xf32>
    %10 = vector.broadcast %9 : vector<1x4xf32> to vector<8x4xf32>
    %11 = arith.addf %8, %10 : vector<8x4xf32>
    %c0_10 = arith.constant 0 : index
    %c0_11 = arith.constant 0 : index
    %12 = vector.load %arg5[%c0_10, %c0_11] : memref<8x4xf32, #tpu.memory_space<vmem>>, vector<8x4xf32>
    tpu.vector_store %arg5[%c0_10, %c0_11], %11 {strides = array<i32>} : memref<8x4xf32, #tpu.memory_space<vmem>>, vector<8x4xf32>,
    return
  }
}

</mosaic_0001>

<llo_original>
// kernel: _head_small.1
$region0: #{_head_small.1}
  #allocation0 [shape = 'u32[]', space=smem, size = 0x4, offset = 0x4, fixed_abs, tag = 'smem constant byte address 0x4 - core index']
  #allocation1 [shape = 'u32[144,128]{1,0:T(1,128)}', space=vmem, size = 0x12000, scoped, tag = 'internal scratch']
  %s0 = inlined_call_operand.hbm [shape: f32[8,32], index: 0, kind: input, shape index: {}]
  %s1 = inlined_call_operand.vmem [shape: f32[32,32], index: 1, kind: input, shape index: {}]
  %s2 = inlined_call_operand.vmem [shape: f32[1,32], index: 2, kind: input, shape index: {}]
  %s3 = inlined_call_operand.vmem [shape: f32[32,4], index: 3, kind: input, shape index: {}]
  %s4 = inlined_call_operand.vmem [shape: f32[1,4], index: 4, kind: input, shape index: {}]
  %s5 = inlined_call_operand.vmem [shape: f32[8,4], index: 5, kind: output, shape index: {}]
  %s6 = sld [smem:[#allocation0]]
  $region34: #{_head_small.1} parent=0
    _
  %s8 = ssub.s32 1, %s6
  %s9 = scalar_select 0, %s8, %s6
  $region1: #{_head_small.1} parent=0
    #allocation2 [shape = 'u8[4096]{0}', space=vmem, size = 0x1000, scoped, tag = 'input window, operand 0, single buffered']
    #allocation3 [shape = 's32[1]{0}', space=sflag, size = 0x4, scoped, tag = 'scoped memory for _head_small.1']
    %10 = vsyncpa [#allocation3], 0
    // Predicated region
    $region2: #{_head_small.1} parent=1 // pred_check
      _
    $region3: #{_head_small.1} parent=1 // pred_check_branch
      %12 = sbr.rel (0) target = $region5
    $region4: #{_head_small.1} parent=1 // pred_region
      %s14 = ssub.s32 128, 128
      %15 = vsyncadd [#allocation3], %s14
      %s17 = sshll.u32 [#allocation2], 4
      %s18 = int_to_ptr.vmem [resolvable:$true] %s17
      %20 = dma.hbm_to_vmem [thread:$0]  %s0, 128, %s18, [#allocation3]
    $region5: #{_head_small.1} parent=1 // pred_fallthru
      _
    // Predicated region
    $region6: #{_head_small.1} parent=1 // pred_check
      _
    $region7: #{_head_small.1} parent=1 // pred_check_branch
      %22 = sbr.rel (0) target = $region9
    $region8: #{_head_small.1} parent=1 // pred_region
      _
    $region9: #{_head_small.1} parent=1 // pred_fallthru
      _
    // Predicated region
    $region10: #{_head_small.1} parent=1 // pred_check
      _
    $region11: #{_head_small.1} parent=1 // pred_check_branch
      %24 = sbr.rel (0) target = $region13
    $region12: #{_head_small.1} parent=1 // pred_region
      _
    $region13: #{_head_small.1} parent=1 // pred_fallthru
      _
    // Predicated region
    $region14: #{_head_small.1} parent=1 // pred_check
      _
    $region15: #{_head_small.1} parent=1 // pred_check_branch
      %26 = sbr.rel (0) target = $region17
    $region16: #{_head_small.1} parent=1 // pred_region
      _
    $region17: #{_head_small.1} parent=1 // pred_fallthru
      _
    // Predicated region
    $region18: #{_head_small.1} parent=1 // pred_check
      _
    $region19: #{_head_small.1} parent=1 // pred_check_branch
      %28 = sbr.rel (0) target = $region21
    $region20: #{_head_small.1} parent=1 // pred_region
      _
    $region21: #{_head_small.1} parent=1 // pred_fallthru
      _
    // Predicated region
    $region22: #{_head_small.1} parent=1 // pred_check
      _
    $region23: #{_head_small.1} parent=1 // pred_check_branch
      %30 = sbr.rel (0) target = $region25
    $region24: #{_head_small.1} parent=1 // pred_region
      %31 = dma.done [#allocation3], 128
    $region25: #{_head_small.1} parent=1 // pred_fallthru
      _
    %v32 = vld [vmem:[#allocation2] sm:$0xff]
    %v33 = vld [vmem:[%s1] sm:$0xff]
    %v34 = vld [vmem:[%s1 + $0x8] sm:$0xff]
    %v35 = vld [vmem:[%s1 + $0x10] sm:$0xff]
    %v36 = vld [vmem:[%s1 + $0x18] sm:$0xff]
    %v37 = vld [vmem:[%s2] sm:$0x1]
    %v39 = vlaneseq
    %v40 = vshrl.u32 %v39, 7
    %v41 = vsub.s32 0, %v40
    %v42 = vrot.slane %v37, %v41
    %vm44 = vcmask 261120
    %v46 = vsel %vm44, %v32, 0
    %48 = vmatprep.subr.mxu0 0.0
    %49 = vmatpush1.msra.mxu0 0.0
    %50 = vmatprep.subr.mxu0 0.0
    %51 = vmatpush1.msra.mxu0 0.0
    %52 = vmatprep.subr.mxu0 0.0
    %53 = vmatpush1.msra.mxu0 0.0
    %54 = vmatprep.subr.mxu0 0.0
    %55 = vmatpush1.msra.mxu0 0.0
    %56 = vmatprep.subr.mxu0 0.0
    %57 = vmatpush1.msra.mxu0 0.0
    %58 = vmatprep.subr.mxu0 0.0
    %59 = vmatpush1.msra.mxu0 0.0
    %60 = vmatprep.subr.mxu0 0.0
    %61 = vmatpush1.msra.mxu0 0.0
    %62 = vmatprep.subr.mxu0 0.0
    %63 = vmatpush1.msra.mxu0 0.0
    %64 = vmatprep.subr.mxu0 0.0
    %65 = vmatpush1.msra.mxu0 0.0
    %66 = vmatprep.subr.mxu0 0.0
    %67 = vmatpush1.msra.mxu0 0.0
    %68 = vmatprep.subr.mxu0 0.0
    %69 = vmatpush1.msra.mxu0 0.0
    %70 = vmatprep.subr.mxu0 0.0
    %71 = vmatpush1.msra.mxu0 0.0
    %72 = vmatprep.subr.mxu0 0.0
    %73 = vmatpush1.msra.mxu0 %v36
    %74 = vmatprep.subr.mxu0 0.0
    %75 = vmatpush1.msra.mxu0 %v35
    %76 = vmatprep.subr.mxu0 0.0
    %77 = vmatpush1.msra.mxu0 %v34
    %78 = vmatprep.subr.mxu0 0.0
    %79 = vmatpush1.msra.mxu0 %v33
    %80 = vmatprep.subr.mxu0 0.0
    %81 = vmatpush2.msra.mxu0 0.0
    %82 = vmatprep.subr.mxu0 0.0
    %83 = vmatpush2.msra.mxu0 0.0
    %84 = vmatprep.subr.mxu0 0.0
    %85 = vmatpush2.msra.mxu0 0.0
    %86 = vmatprep.subr.mxu0 0.0
    %87 = vmatpush2.msra.mxu0 0.0
    %88 = vmatprep.subr.mxu0 0.0
    %89 = vmatpush2.msra.mxu0 0.0
    %90 = vmatprep.subr.mxu0 0.0
    %91 = vmatpush2.msra.mxu0 0.0
    %92 = vmatprep.subr.mxu0 0.0
    %93 = vmatpush2.msra.mxu0 0.0
    %94 = vmatprep.subr.mxu0 0.0
    %95 = vmatpush2.msra.mxu0 0.0
    %96 = vmatprep.subr.mxu0 0.0
    %97 = vmatpush2.msra.mxu0 0.0
    %98 = vmatprep.subr.mxu0 0.0
    %99 = vmatpush2.msra.mxu0 0.0
    %100 = vmatprep.subr.mxu0 0.0
    %101 = vmatpush2.msra.mxu0 0.0
    %102 = vmatprep.subr.mxu0 0.0
    %103 = vmatpush2.msra.mxu0 0.0
    %104 = vmatprep.subr.mxu0 0.0
    %105 = vmatpush2.msra.mxu0 0.0
    %106 = vmatprep.subr.mxu0 0.0
    %107 = vmatpush2.msra.mxu0 0.0
    %108 = vmatprep.subr.mxu0 0.0
    %109 = vmatpush2.msra.mxu0 0.0
    %110 = vmatprep.subr.mxu0 0.0
    %111 = vmatpush2.msra.mxu0 0.0
    %112 = vmatprep.mubr.f32.mxu0 0.0
    %113 = vmatmul.mubr.f32.gmra.mxu0 %v46
    %v114 = vpop.f32.mrf.mxu0
    %v115 = vadd.f32 %v42, %v114
    %v116 = vpop.f32.mrf.mxu0
    %117 = vdwg.mxu0
    %v118 = vtanh.pop %v115
    %v119 = vld [vmem:[%s3] sm:$0xff]
    %v120 = vld [vmem:[%s3 + $0x8] sm:$0xff]
    %v121 = vld [vmem:[%s3 + $0x10] sm:$0xff]
    %v122 = vld [vmem:[%s3 + $0x18] sm:$0xff]
    %v123 = vld [vmem:[%s4] sm:$0x1]
    %v125 = vlaneseq
    %v126 = vshrl.u32 %v125, 7
    %v127 = vsub.s32 0, %v126
    %v128 = vrot.slane %v123, %v127
    %v131 = vsel %vm44, %v118, 0
    %133 = vmatprep.subr.mxu0 0.0
    %134 = vmatpush1.msra.mxu0 0.0
    %135 = vmatprep.subr.mxu0 0.0
    %136 = vmatpush1.msra.mxu0 0.0
    %137 = vmatprep.subr.mxu0 0.0
    %138 = vmatpush1.msra.mxu0 0.0
    %139 = vmatprep.subr.mxu0 0.0
    %140 = vmatpush1.msra.mxu0 0.0
    %141 = vmatprep.subr.mxu0 0.0
    %142 = vmatpush1.msra.mxu0 0.0
    %143 = vmatprep.subr.mxu0 0.0
    %144 = vmatpush1.msra.mxu0 0.0
    %145 = vmatprep.subr.mxu0 0.0
    %146 = vmatpush1.msra.mxu0 0.0
    %147 = vmatprep.subr.mxu0 0.0
    %148 = vmatpush1.msra.mxu0 0.0
    %149 = vmatprep.subr.mxu0 0.0
    %150 = vmatpush1.msra.mxu0 0.0
    %151 = vmatprep.subr.mxu0 0.0
    %152 = vmatpush1.msra.mxu0 0.0
    %153 = vmatprep.subr.mxu0 0.0
    %154 = vmatpush1.msra.mxu0 0.0
    %155 = vmatprep.subr.mxu0 0.0
    %156 = vmatpush1.msra.mxu0 0.0
    %157 = vmatprep.subr.mxu0 0.0
    %158 = vmatpush1.msra.mxu0 %v122
    %159 = vmatprep.subr.mxu0 0.0
    %160 = vmatpush1.msra.mxu0 %v121
    %161 = vmatprep.subr.mxu0 0.0
    %162 = vmatpush1.msra.mxu0 %v120
    %163 = vmatprep.subr.mxu0 0.0
    %164 = vmatpush1.msra.mxu0 %v119
    %165 = vmatprep.subr.mxu0 0.0
    %166 = vmatpush2.msra.mxu0 0.0
    %167 = vmatprep.subr.mxu0 0.0
    %168 = vmatpush2.msra.mxu0 0.0
    %169 = vmatprep.subr.mxu0 0.0
    %170 = vmatpush2.msra.mxu0 0.0
    %171 = vmatprep.subr.mxu0 0.0
    %172 = vmatpush2.msra.mxu0 0.0
    %173 = vmatprep.subr.mxu0 0.0
    %174 = vmatpush2.msra.mxu0 0.0
    %175 = vmatprep.subr.mxu0 0.0
    %176 = vmatpush2.msra.mxu0 0.0
    %177 = vmatprep.subr.mxu0 0.0
    %178 = vmatpush2.msra.mxu0 0.0
    %179 = vmatprep.subr.mxu0 0.0
    %180 = vmatpush2.msra.mxu0 0.0
    %181 = vmatprep.subr.mxu0 0.0
    %182 = vmatpush2.msra.mxu0 0.0
    %183 = vmatprep.subr.mxu0 0.0
    %184 = vmatpush2.msra.mxu0 0.0
    %185 = vmatprep.subr.mxu0 0.0
    %186 = vmatpush2.msra.mxu0 0.0
    %187 = vmatprep.subr.mxu0 0.0
    %188 = vmatpush2.msra.mxu0 0.0
    %189 = vmatprep.subr.mxu0 0.0
    %190 = vmatpush2.msra.mxu0 0.0
    %191 = vmatprep.subr.mxu0 0.0
    %192 = vmatpush2.msra.mxu0 0.0
    %193 = vmatprep.subr.mxu0 0.0
    %194 = vmatpush2.msra.mxu0 0.0
    %195 = vmatprep.subr.mxu0 0.0
    %196 = vmatpush2.msra.mxu0 0.0
    %197 = vmatprep.mubr.f32.mxu0 0.0
    %198 = vmatmul.mubr.f32.gmra.mxu0 %v131
    %v199 = vpop.f32.mrf.mxu0
    %v200 = vadd.f32 %v128, %v199
    %v201 = vpop.f32.mrf.mxu0
    %202 = vdwg.mxu0
    %vm203 = vcmask 31744
    %204 = vst.msk [vmem:[%s5] sm:$0xff] %vm203, %v200
    // Predicated region
    $region26: #{_head_small.1} parent=1 // pred_check
      _
    $region27: #{_head_small.1} parent=1 // pred_check_branch
      %206 = sbr.rel (0) target = $region29
    $region28: #{_head_small.1} parent=1 // pred_region
      _
    $region29: #{_head_small.1} parent=1 // pred_fallthru
      _
    // Predicated region
    $region30: #{_head_small.1} parent=1 // pred_check
      _
    $region31: #{_head_small.1} parent=1 // pred_check_branch
      %208 = sbr.rel (0) target = $region33
    $region32: #{_head_small.1} parent=1 // pred_region
      _
    $region33: #{_head_small.1} parent=1 // pred_fallthru
      _
    %209 = vsyncpa [#allocation3], 1

</llo_original>
